<compile_context>
chip_gen: v7x
topology: tpu7x:2x2x1
jax: 0.10.0
libtpu: 0.0.40
codegen_flags: <defaults>
</compile_context>

<pallas_src>
import jax
import jax.numpy as jnp
from jax.experimental import pallas as pl
from jax.experimental.pallas import tpu as pltpu


# ---------------------------------------------------------------------------
# Parameter construction (deterministic, mirrors the torch __init__)
# ---------------------------------------------------------------------------
def build_positional_encoding(d_model: int, max_seq_len: int) -> jnp.ndarray:
    """Full PE buffer (d_model, max_seq_len) -- reference only (not fed to the kernel)."""
    assert d_model == max_seq_len, (
        "module __init__ only type-checks when d_model == max_seq_len")
    pe = jnp.zeros((d_model, max_seq_len), dtype=jnp.float32)
    pos = jnp.arange(0, max_seq_len, dtype=jnp.float32)          # (L,)
    _2i = jnp.arange(0, max_seq_len, 2, dtype=jnp.float32)       # (ceil(L/2),)
    vals = jnp.sin(pos[:, None] / (10000.0 ** (_2i[None, :] / float(d_model))))
    # both even and odd strided columns get sin() -- exactly as written in torch
    pe = pe.at[:, 0::2].set(vals)
    n_odd = pe[:, 1::2].shape[1]
    pe = pe.at[:, 1::2].set(vals[:, :n_odd])
    return pe


def make_inv_denom(d_model: int, max_seq_len: int) -> jnp.ndarray:
    """Tiny (1, max_seq_len) vector: inv_denom[c] = 1 / 10000**(2*floor(c/2)/d_model).

    This is the only "parameter" the kernel needs -- PE[r, c] == sin(r * inv_denom[c]).
    """
    assert d_model == max_seq_len, (
        "module __init__ only type-checks when d_model == max_seq_len")
    cols = jnp.arange(max_seq_len, dtype=jnp.int32)
    _2i = (2 * (cols // 2)).astype(jnp.float32)
    denom = 10000.0 ** (_2i / float(d_model))
    return (1.0 / denom).reshape(1, max_seq_len).astype(jnp.float32)


# ---------------------------------------------------------------------------
# Pallas kernel: out_tile = x_tile + sin(pos * inv_denom)   (HBM-bound add)
# ---------------------------------------------------------------------------
def _pe_add_kernel(x_ref, inv_ref, o_ref):
    br, bc = x_ref.shape
    # absolute row position of each element of this tile (grid axis 0 = rows)
    pos = (pl.program_id(0) * br
           + jax.lax.broadcasted_iota(jnp.int32, (br, bc), 0)).astype(jnp.float32)
    # PE regenerated in-kernel: removes a full-size HBM read stream; sin/mul
    # run on EUP/VPU slots which have ample slack in this bandwidth-bound add.
    pe = jnp.sin(pos * inv_ref[...])                 # inv_ref is (1, bc), broadcasts
    o_ref[...] = (x_ref[...].astype(jnp.float32) + pe).astype(o_ref.dtype)


def positional_encoding_forward(input_embeds: jnp.ndarray,
                                inv_denom: jnp.ndarray,
                                *,
                                block_rows: int = 1024,
                                block_cols: int = 2048,
                                resident_budget_bytes: int = 32 * 1024 * 1024,
                                donate_input: bool = False) -> jnp.ndarray:
    """out = input_embeds + PE[:seq_len, :], with PE regenerated in-kernel.

    input_embeds: (batch, seq_len); inv_denom: (1, max_seq_len) from make_inv_denom.
    Module constraints (asserted): max_seq_len == seq_len and batch == seq_len
    (the torch broadcast is the identity in the only valid configuration).
    """
    batch, seq_len = input_embeds.shape
    assert inv_denom.shape == (1, seq_len), (
        "module constraint: max_seq_len must equal seq_len")
    assert batch == seq_len, (
        "module constraint: PE[:seq_len, :] broadcast requires batch == seq_len")
    itemsize = jnp.dtype(input_embeds.dtype).itemsize

    # ---- tile selection ---------------------------------------------------
    # Columns: full rows preferred (longest contiguous DMA bursts, unmasked
    # lane-dense stores); only split the lane axis for very wide seq_len,
    # keeping the split width a multiple of 128.
    if seq_len <= block_cols:
        bc = seq_len
    else:
        bc = (block_cols // 128) * 128

    # Rows: biggest multiple-of-8 block keeping the two streams (x, out),
    # double-buffered, inside the resident-VMEM budget.
    bytes_per_row = 2 * 2 * bc * itemsize
    br_budget = max(8, (resident_budget_bytes // bytes_per_row) // 8 * 8)
    br = min(block_rows, batch, br_budget)
    if batch >= 16:
        # guarantee >=2 row blocks so the 'parallel' axis can shard across
        # v7x's two TensorCores (measured no-op on single-TC v5e/v6e)
        half = ((pl.cdiv(batch, 2) + 7) // 8) * 8
        br = min(br, half)
    if br < batch:
        br = max(8, (br // 8) * 8)     # (8, 128) tiling rule on the sublane dim
    else:
        br = batch                     # single full block (small problems)

    n_row = pl.cdiv(batch, br)
    n_col = pl.cdiv(seq_len, bc)

    # ---- grid / specs -------------------------------------------------------
    if n_col == 1:
        grid = (n_row,)
        x_spec = pl.BlockSpec((br, bc), lambda i: (i, 0))
        inv_spec = pl.BlockSpec((1, bc), lambda i: (0, 0))
        out_spec = pl.BlockSpec((br, bc), lambda i: (i, 0))
        dims = ("parallel",)
    else:
        grid = (n_row, n_col)
        x_spec = pl.BlockSpec((br, bc), lambda i, j: (i, j))
        inv_spec = pl.BlockSpec((1, bc), lambda i, j: (0, j))
        out_spec = pl.BlockSpec((br, bc), lambda i, j: (i, j))
        dims = ("parallel", "parallel")

    cost = pl.CostEstimate(
        flops=3 * batch * seq_len,                      # iota-add, mul, add
        transcendentals=batch * seq_len,                # one sin per element
        bytes_accessed=(2 * batch * seq_len + n_row * seq_len) * itemsize,
    )

    return pl.pallas_call(
        _pe_add_kernel,
        out_shape=jax.ShapeDtypeStruct(input_embeds.shape, input_embeds.dtype),
        grid=grid,
        in_specs=[x_spec, inv_spec],
        out_specs=out_spec,
        compiler_params=pltpu.CompilerParams(
            dimension_semantics=dims,
            vmem_limit_bytes=48 * 1024 * 1024,          # safe on v5e/v6e/v7x
        ),
        cost_estimate=cost,
        input_output_aliases={0: 0} if donate_input else {},
    )(input_embeds, inv_denom)


# ---------------------------------------------------------------------------
# Demo / self-check
# ---------------------------------------------------------------------------
if __name__ == "__main__":
    # Module constraint: d_model == max_seq_len == seq_len == batch.
    d_model = max_seq_len = batch = seq_len = 128

    key = jax.random.PRNGKey(0)
    input_embeds = jax.random.normal(key, (batch, seq_len), dtype=jnp.float32)

    inv_denom = make_inv_denom(d_model, max_seq_len)
    out = positional_encoding_forward(input_embeds, inv_denom)
    out = jax.block_until_ready(out)

    # pure-JAX reference mirroring the torch module (full PE buffer + add)
    pe = build_positional_encoding(d_model, max_seq_len)
    ref = input_embeds + pe[:seq_len, :]

    assert out.shape == input_embeds.shape
    # tolerance covers f32 argument rounding (pos * inv vs pos / denom, args up
    # to ~127 rad) plus any sin range-reduction difference between lowerings;
    # any semantic error (wrong rows / wrong denom) would be O(0.1-1).
    max_diff = float(jnp.max(jnp.abs(out - ref)))
    assert jnp.allclose(out, ref, atol=5e-4, rtol=1e-5), f"max|diff|={max_diff:.3e}"

    print("KERNEL_OK")
</pallas_src>

<mosaic_0001>
module attributes {stable_mosaic.version = 11 : i64} {
  func.func @_pe_add_kernel(%arg0: i32, %arg1: memref<64x128xf32, #tpu.memory_space<vmem>>, %arg2: memref<1x128xf32, #tpu.memory_space<vmem>>, %arg3: memref<64x128xf32, #tpu.memory_space<vmem>>) attributes {dimension_semantics = [#tpu.dimension_semantics<parallel>], iteration_bounds = array<i64: 2>, scalar_prefetch = 0 : i64, scratch_operands = 0 : i64, tpu.core_type = #tpu.core_type<tc>, window_params = [{transform_indices = @transform_0, window_bounds = array<i64: 64, 128>}, {pipeline_mode = #tpu.pipeline_mode<synchronous>, transform_indices = @transform_1, window_bounds = array<i64: 1, 128>}, {transform_indices = @transform_2, window_bounds = array<i64: 64, 128>}]} {
    %c64_i32 = arith.constant 64 : i32
    %0 = arith.muli %arg0, %c64_i32 : i32
    %1 = tpu.iota {dimensions = array<i32: 0>} : vector<64x128xi32>
    %2 = vector.broadcast %0 : i32 to vector<64x128xi32>
    %3 = arith.addi %2, %1 : vector<64x128xi32>
    %4 = arith.sitofp %3 : vector<64x128xi32> to vector<64x128xf32>
    %c0 = arith.constant 0 : index
    %c0_0 = arith.constant 0 : index
    %5 = vector.load %arg2[%c0, %c0_0] : memref<1x128xf32, #tpu.memory_space<vmem>>, vector<1x128xf32>
    %6 = vector.broadcast %5 : vector<1x128xf32> to vector<64x128xf32>
    %7 = arith.mulf %4, %6 : vector<64x128xf32>
    %8 = math.sin %7 : vector<64x128xf32>
    %c0_1 = arith.constant 0 : index
    %c0_2 = arith.constant 0 : index
    %9 = vector.load %arg1[%c0_1, %c0_2] : memref<64x128xf32, #tpu.memory_space<vmem>>, vector<64x128xf32>
    %10 = arith.addf %9, %8 : vector<64x128xf32>
    %c0_3 = arith.constant 0 : index
    %c0_4 = arith.constant 0 : index
    %11 = vector.load %arg3[%c0_3, %c0_4] : memref<64x128xf32, #tpu.memory_space<vmem>>, vector<64x128xf32>
    tpu.vector_store %arg3[%c0_3, %c0_4], %10 {strides = array<i32>} : memref<64x128xf32, #tpu.memory_space<vmem>>, vector<64x128xf32>,
    return
  }
  func.func @transform_0(%arg0: i32) -> (i32, i32) {
    %c0_i32 = arith.constant 0 : i32
    %c0_i32_0 = arith.constant 0 : i32
    return %arg0, %c0_i32 : i32, i32
  }
  func.func @transform_1(%arg0: i32) -> (i32, i32) {
    %c0_i32 = arith.constant 0 : i32
    %c0_i32_0 = arith.constant 0 : i32
    %c0_i32_1 = arith.constant 0 : i32
    return %c0_i32, %c0_i32_0 : i32, i32
  }
  func.func @transform_2(%arg0: i32) -> (i32, i32) {
    %c0_i32 = arith.constant 0 : i32
    %c0_i32_0 = arith.constant 0 : i32
    return %arg0, %c0_i32 : i32, i32
  }
}

</mosaic_0001>

<llo_original>
// kernel: tpu_custom_call.1
$region0: #{tpu_custom_call.1}
  #allocation0 [shape = 'u32[]', space=smem, size = 0x4, offset = 0x4, fixed_abs, tag = 'smem constant byte address 0x4 - core index']
  #allocation1 [shape = 'u32[144,128]{1,0:T(1,128)}', space=vmem, size = 0x12000, scoped, tag = 'internal scratch']
  %s0 = inlined_call_operand.hbm [shape: f32[128,128], index: 0, kind: input, shape index: {}]
  %s1 = inlined_call_operand.vmem [shape: f32[1,128], index: 1, kind: input, shape index: {}]
  %s2 = inlined_call_operand.hbm [shape: f32[128,128], index: 2, kind: output, shape index: {}]
  %s3 = sld [smem:[#allocation0]]
  $region45: #{tpu_custom_call.1} parent=0
    _
  %s5 = ssub.s32 1, %s3
  %s6 = scalar_select 0, %s5, %s3
  $region1: #{tpu_custom_call.1} parent=0
    #allocation2 [shape = 'u8[65536]{0}', space=vmem, size = 0x10000, scoped, tag = 'input window, operand 0']
    #allocation3 [shape = 's32[2]{0}', space=sflag, size = 0x8, scoped, tag = 'scoped memory for tpu_custom_call.1']
    #allocation4 [shape = 's32[2]{0}', space=sflag, size = 0x8, scoped, tag = 'scoped memory for tpu_custom_call.1']
    #allocation5 [shape = 'u8[65536]{0}', space=vmem, size = 0x10000, scoped, tag = 'output window, operand 0']
    %7 = vsyncpa [#allocation3], 0
    %s8 = scalar_lea.sflag [#allocation3], 1
    %9 = vsyncpa %s8, 0
    %10 = vsyncpa [#allocation4], 0
    %s11 = scalar_lea.sflag [#allocation4], 1
    %12 = vsyncpa %s11, 0
    loop: start=0, step=1, limit=4
    $region2: #{tpu_custom_call.1} parent=1 // loop_pre_header
      _
    $region3: #{tpu_custom_call.1} parent=1 // loop_header
      %s14 = sphi 0, %s18
      %p15 = scmp.ge.s32.totalorder %s14, 4
      %s24 = sphi 0, %s26
      %s27 = sphi 0, %s24
      %s28 = sphi 0, %s27
      %s44 = sphi 0, %s28
      %s48 = sphi 0, %s48
      %s50 = sphi 0, %s48
      %s51 = sphi 0, %s50
      %s65 = sphi 0, %s51
      %s71 = sphi 0, %s73
      %s74 = sphi 0, %s71
      %s75 = sphi 0, %s74
      %s91 = sphi 0, %s75
    $region4: #{tpu_custom_call.1} parent=1 // loop_header_branch
      %17 = sbr.rel (%p15) target = $region8
    $region5: #{tpu_custom_call.1} parent=1 // loop_body
      %s19 = ssub.s32 %s14, 1
      %s20 = ssub.s32 %s14, 2
      %s21 = sadd.s32 %s14, 1
      %s22 = ssub.s32 %s14, %s21
      %p23 = scmp.eq.s32.totalorder %s22, 0
      %s25 = sadd.s32 %s24, 1
      %s26 = scalar_select %p23, %s24, %s25
      %p29 = pneg %p23
      %p30 = scmp.eq.s32.totalorder %s14, 1
      %p31 = por %p29, %p30
      %p32 = scmp.ne.s32.totalorder %s24, %s27
      %p33 = scmp.eq.s32.totalorder %s14, 0
      %p34 = por %p32, %p33
      %p35 = scmp.ne.s32.totalorder %s24, %s27
      %p36 = scmp.eq.s32.totalorder %s19, 1
      %p37 = por %p35, %p36
      %p38 = scmp.ne.s32.totalorder %s27, %s28
      %p39 = scmp.eq.s32.totalorder %s19, 0
      %p40 = por %p38, %p39
      %p41 = scmp.ne.s32.totalorder %s27, %s28
      %p42 = scmp.eq.s32.totalorder %s20, 1
      %p43 = por %p41, %p42
      %p45 = scmp.ne.s32.totalorder %s28, %s44
      %p46 = scmp.eq.s32.totalorder %s20, 0
      %p47 = por %p45, %p46
      %s49 = sadd.s32 %s48, 1
      %p52 = scmp.eq.s32.totalorder %s14, 1
      %p53 = scmp.ne.s32.totalorder %s48, %s50
      %p54 = scmp.eq.s32.totalorder %s14, 0
      %p55 = por %p53, %p54
      %p56 = scmp.ne.s32.totalorder %s48, %s50
      %p57 = scmp.eq.s32.totalorder %s19, 1
      %p58 = por %p56, %p57
      %p59 = scmp.ne.s32.totalorder %s50, %s51
      %p60 = scmp.eq.s32.totalorder %s19, 0
      %p61 = por %p59, %p60
      %p62 = scmp.ne.s32.totalorder %s50, %s51
      %p63 = scmp.eq.s32.totalorder %s20, 1
      %p64 = por %p62, %p63
      %p66 = scmp.ne.s32.totalorder %s51, %s65
      %p67 = scmp.eq.s32.totalorder %s20, 0
      %p68 = por %p66, %p67
      %s69 = ssub.s32 %s14, %s21
      %p70 = scmp.eq.s32.totalorder %s69, 0
      %s72 = sadd.s32 %s71, 1
      %s73 = scalar_select %p70, %s71, %s72
      %p76 = pneg %p70
      %p77 = scmp.eq.s32.totalorder %s14, 1
      %p78 = por %p76, %p77
      %p79 = scmp.ne.s32.totalorder %s71, %s74
      %p80 = scmp.eq.s32.totalorder %s14, 0
      %p81 = por %p79, %p80
      %p82 = scmp.ne.s32.totalorder %s71, %s74
      %p83 = scmp.eq.s32.totalorder %s19, 1
      %p84 = por %p82, %p83
      %p85 = scmp.ne.s32.totalorder %s74, %s75
      %p86 = scmp.eq.s32.totalorder %s19, 0
      %p87 = por %p85, %p86
      %p88 = scmp.ne.s32.totalorder %s74, %s75
      %p89 = scmp.eq.s32.totalorder %s20, 1
      %p90 = por %p88, %p89
      %p92 = scmp.ne.s32.totalorder %s75, %s91
      %p93 = scmp.eq.s32.totalorder %s20, 0
      %p94 = por %p92, %p93
      %p95 = scmp.le.s32.totalorder 1, %s14
      %p96 = scmp.lt.s32.totalorder %s14, 3
      %p97 = pnand %p95, %p96
      %p98 = pneg %p97
      // Predicated region
      $region9: #{tpu_custom_call.1} parent=5 // pred_check
        _
      $region10: #{tpu_custom_call.1} parent=5 // pred_check_branch
        %100 = sbr.rel (%p97) target = $region12
      $region11: #{tpu_custom_call.1} parent=5 // pred_region
        %s101 = ssub.s32 %s14, 1
        // Predicated region
        $region13: #{tpu_custom_call.1} parent=11 // pred_check
          %p102 = pneg %p61
        $region14: #{tpu_custom_call.1} parent=11 // pred_check_branch
          %104 = sbr.rel (%p102) target = $region16
        $region15: #{tpu_custom_call.1} parent=11 // pred_region
          _
        $region16: #{tpu_custom_call.1} parent=11 // pred_fallthru
          _
      $region12: #{tpu_custom_call.1} parent=5 // pred_fallthru
        _
      %p105 = scmp.lt.s32.totalorder %s14, 2
      // Predicated region
      $region17: #{tpu_custom_call.1} parent=5 // pred_check
        %p106 = pneg %p105
      $region18: #{tpu_custom_call.1} parent=5 // pred_check_branch
        %108 = sbr.rel (%p106) target = $region20
      $region19: #{tpu_custom_call.1} parent=5 // pred_region
        // Predicated region
        $region21: #{tpu_custom_call.1} parent=19 // pred_check
          %p109 = pneg %p34
        $region22: #{tpu_custom_call.1} parent=19 // pred_check_branch
          %111 = sbr.rel (%p109) target = $region24
        $region23: #{tpu_custom_call.1} parent=19 // pred_region
          %s112 = sand.u32 %s24, 1
          %s113 = scalar_lea.sflag [#allocation3], %s112
          %s114 = sand.u32 %s24, 1
          %s115 = smul.addr %s114, 64
          %s116 = scalar_lea.vmem [#allocation2], %s115
          %s117 = smul.u32 8, %s14
          %s119 = ssub.s32 1024, 1024
          %120 = vsyncadd %s113, %s119
          %s121 = smul.addr %s117, 128
          %s122 = scalar_lea.hbm %s0, %s121
          %s123 = sshll.u32 %s116, 4
          %s124 = int_to_ptr.vmem [resolvable:$true] %s123
          %129 = dma.hbm_to_vmem [thread:$0]  %s122, 1024, %s124, %s113, 128, 128, 8
        $region24: #{tpu_custom_call.1} parent=19 // pred_fallthru
          _
      $region20: #{tpu_custom_call.1} parent=5 // pred_fallthru
        _
      %p130 = scmp.le.s32.totalorder 1, %s14
      %p131 = scmp.lt.s32.totalorder %s14, 3
      %p132 = pnand %p130, %p131
      %p133 = pneg %p132
      // Predicated region
      $region25: #{tpu_custom_call.1} parent=5 // pred_check
        _
      $region26: #{tpu_custom_call.1} parent=5 // pred_check_branch
        %135 = sbr.rel (%p132) target = $region28
      $region27: #{tpu_custom_call.1} parent=5 // pred_region
        %s136 = ssub.s32 %s14, 1
        %s137 = sand.u32 %s27, 1
        %s138 = scalar_lea.sflag [#allocation3], %s137
        %s139 = sand.u32 %s27, 1
        %s140 = smul.addr %s139, 64
        %s141 = scalar_lea.vmem [#allocation2], %s140
        // Predicated region
        $region29: #{tpu_custom_call.1} parent=27 // pred_check
          %p142 = pneg %p40
        $region30: #{tpu_custom_call.1} parent=27 // pred_check_branch
          %144 = sbr.rel (%p142) target = $region32
        $region31: #{tpu_custom_call.1} parent=27 // pred_region
          %145 = dma.done %s138, 1024
        $region32: #{tpu_custom_call.1} parent=27 // pred_fallthru
          _
        %s146 = sand.u32 %s27, 1
        %s147 = scalar_lea.sflag [#allocation3], %s146
        %s148 = sand.u32 %s27, 1
        %s149 = smul.addr %s148, 64
        %s150 = scalar_lea.vmem [#allocation2], %s149
        %p151 = pneg %p40
        %p152 = pneg %p37
        %p153 = pneg %p61
        %p154 = pneg %p58
        %p155 = pneg %p87
        %p156 = pneg %p84
        %s157 = sand.u32 %s74, 1
        %s158 = scalar_lea.sflag [#allocation4], %s157
        %s159 = sand.u32 %s74, 1
        %s160 = smul.addr %s159, 64
        %s161 = scalar_lea.vmem [#allocation5], %s160
        %s162 = smul.u32 8, %s19
        %s163 = smul.u32 8, %s19
        %s164 = smul.u32 %s19, 64
        %v165 = vlaneseq
        %v166 = vshrl.u32 %v165, 7
        %v167 = vadd.s32 %v166, 8
        %v168 = vadd.s32 %v166, 16
        %v169 = vadd.s32 %v166, 24
        %v170 = vadd.s32 %v166, 32
        %v171 = vadd.s32 %v166, 40
        %v172 = vadd.s32 %v166, 48
        %v173 = vadd.s32 %v166, 56
        %v174 = vstv %s164
        %v175 = vadd.s32 %v174, %v166
        %v176 = vadd.s32 %v174, %v167
        %v177 = vadd.s32 %v174, %v168
        %v178 = vadd.s32 %v174, %v169
        %v179 = vadd.s32 %v174, %v170
        %v180 = vadd.s32 %v174, %v171
        %v181 = vadd.s32 %v174, %v172
        %v182 = vadd.s32 %v174, %v173
        %v183 = vcvt.s32.f32 %v175
        %v184 = vcvt.s32.f32 %v176
        %v185 = vcvt.s32.f32 %v177
        %v186 = vcvt.s32.f32 %v178
        %v187 = vcvt.s32.f32 %v179
        %v188 = vcvt.s32.f32 %v180
        %v189 = vcvt.s32.f32 %v181
        %v190 = vcvt.s32.f32 %v182
        %v191 = vld [vmem:[%s1] sm:$0x1]
        %v193 = vlaneseq
        %v194 = vshrl.u32 %v193, 7
        %v195 = vsub.s32 0, %v194
        %v196 = vrot.slane %v191, %v195
        %v198 = vmul.f32 %v183, %v196
        %v199 = vmul.f32 %v184, %v196
        %v200 = vmul.f32 %v185, %v196
        %v201 = vmul.f32 %v186, %v196
        %v202 = vmul.f32 %v187, %v196
        %v203 = vmul.f32 %v188, %v196
        %v204 = vmul.f32 %v189, %v196
        %v205 = vmul.f32 %v190, %v196
        %v206 = vand.u32 2147483647, %v198
        %vm207 = vcmp.le.f32.partialorder %v206, 0.7853982
        %vm208 = vcmp.lt.s32.totalorder %v198, 0
        %v209 = vand.u32 %v198, 2139095040
        %v210 = vshrl.u32 %v209, 23
        %v211 = vsub.s32 %v210, 127
        %v212 = vand.u32 2147483647, %v198
        %v213 = vand.u32 %v212, 8388607
        %v214 = vor.u32 %v213, 8388608
        %v215 = vsub.s32 0, %v214
        %v216 = vadd.s32 %v211, 1
        %vm217 = vcmp.gt.s32.totalorder %v216, 0
        %v218 = vsel %vm217, %v216, 0
        %v219 = vshrl.u32 %v218, 5
        %v220 = vand.u32 %v218, 31
        %v221 = vsub.s32 32, %v220
        %v222 = vshrl.u32 683565275, %v221
        %v223 = vshll.u32 683565275, %v220
        %v224 = vshrl.u32 2475754826, %v221
        %v225 = vor.u32 %v223, %v224
        %v226 = vshll.u32 2475754826, %v220
        %v227 = vshrl.u32 2131351028, %v221
        %v228 = vor.u32 %v226, %v227
        %v229 = vshll.u32 2131351028, %v220
        %v230 = vshrl.u32 2102212464, %v221
        %v231 = vor.u32 %v229, %v230
        %v232 = vshll.u32 2102212464, %v220
        %v233 = vshrl.u32 920167782, %v221
        %v234 = vor.u32 %v232, %v233
        %v235 = vshll.u32 920167782, %v220
        %v236 = vshrl.u32 1326507024, %v221
        %v237 = vor.u32 %v235, %v236
        %vm238 = vcmp.lt.s32.totalorder %v219, 1
        %vm239 = vcmp.lt.s32.totalorder %v219, 2
        %vm240 = vcmp.lt.s32.totalorder %v219, 3
        %vm241 = vcmp.lt.s32.totalorder %v219, 4
        %v242 = vsel %vm238, %v222, %v225
        %v243 = vsel %vm241, %v231, 2102212464
        %v244 = vsel %vm240, %v228, %v243
        %v245 = vsel %vm239, %v242, %v244
        %v246 = vsel %vm238, %v225, %v228
        %v247 = vsel %vm241, %v234, 920167782
        %v248 = vsel %vm240, %v231, %v247
        %v249 = vsel %vm239, %v246, %v248
        %v250 = vsel %vm238, %v228, %v231
        %v251 = vsel %vm241, %v237, 1326507024
        %v252 = vsel %vm240, %v234, %v251
        %v253 = vsel %vm239, %v250, %v252
        %v254 = vshll.u32 %v214, 8
        %v255 = vmul.u32.u64.compose %v254, %v253
        %v256 = vextract.low.u32 %v255
        %v257 = vextract.high.u32 %v255
        %v258 = vmul.u32.u64.compose %v254, %v249
        %v259 = vextract.low.u32 %v258
        %v260 = vextract.high.u32 %v258
        %v261 = vmul.u32 %v254, %v245
        %v262 = vadd.s32 %v257, %v259
        %vm263 = vc.u32 %v257, %v259
        %v264 = vadd.s32 %v260, 1
        %v265 = vsel %vm263, %v264, %v260
        %v266 = vadd.s32 %v261, %v265
        %v267 = vadd.s32 %v266, 536870912
        %v268 = vshrl.u32 %v267, 30
        %v269 = vshll.u32 %v268, 30
        %v270 = vsub.s32 %v266, %v269
        %vm271 = vcmp.lt.s32.totalorder %v270, 0
        %v272 = vsub.s32 0, %v270
        %v273 = vsel %vm271, %v272, %v270
        %v274 = vclz %v273
        %v275 = vsub.s32 %v274, 2
        %vm276 = vcmp.gt.s32.totalorder 0, %v275
        %v277 = vsel %vm276, 0, %v275
        %v278 = vsub.s32 32, %v277
        %v279 = vshll.u32 %v270, %v277
        %v280 = vshrl.u32 %v262, %v278
        %v281 = vor.u32 %v279, %v280
        %v282 = vsub.s32 4294967266, %v277
        %v283 = vadd.s32 %v282, 127
        %v284 = vshll.u32 %v283, 23
        %v285 = vor.u32 4788187, %v284
        %v286 = vand.u32 2147483647, %v285
        %v288 = vcvt.s32.f32 %v281
        %v289 = vmul.f32 %v288, %v286
        %v290 = vxor.u32 %v289, 2147483648
        %v291 = vsel %vm208, %v290, %v289
        %v292 = vsub.s32 4, %v268
        %v293 = vsel %vm208, %v292, %v268
        %v294 = vsel %vm207, %v198, %v291
        %v295 = vsel %vm207, 0, %v293
        %v296 = vcosq.f32.pop %v294
        %v297 = vsinq.f32.pop %v294
        %vm298 = vweird.f32 %v198
        %v299 = vadd.s32 %v295, 3
        %v300 = vand.u32 %v299, 3
        %vm301 = vcmp.lt.s32.totalorder %v300, 2
        %vm302 = vcmp.eq.s32.totalorder %v300, 0
        %v303 = vxor.u32 %v297, 2147483648
        %v304 = vsel %vm302, %v296, %v303
        %vm305 = vcmp.eq.s32.totalorder %v300, 2
        %v306 = vxor.u32 %v296, 2147483648
        %v307 = vsel %vm305, %v306, %v297
        %v308 = vsel %vm301, %v304, %v307
        %v309 = vsel %vm298, nan, %v308
        %v310 = vand.u32 2147483647, %v199
        %vm311 = vcmp.le.f32.partialorder %v310, 0.7853982
        %vm312 = vcmp.lt.s32.totalorder %v199, 0
        %v313 = vand.u32 %v199, 2139095040
        %v314 = vshrl.u32 %v313, 23
        %v315 = vsub.s32 %v314, 127
        %v316 = vand.u32 2147483647, %v199
        %v317 = vand.u32 %v316, 8388607
        %v318 = vor.u32 %v317, 8388608
        %v319 = vsub.s32 0, %v318
        %v320 = vadd.s32 %v315, 1
        %vm321 = vcmp.gt.s32.totalorder %v320, 0
        %v322 = vsel %vm321, %v320, 0
        %v323 = vshrl.u32 %v322, 5
        %v324 = vand.u32 %v322, 31
        %v325 = vsub.s32 32, %v324
        %v326 = vshrl.u32 683565275, %v325
        %v327 = vshll.u32 683565275, %v324
        %v328 = vshrl.u32 2475754826, %v325
        %v329 = vor.u32 %v327, %v328
        %v330 = vshll.u32 2475754826, %v324
        %v331 = vshrl.u32 2131351028, %v325
        %v332 = vor.u32 %v330, %v331
        %v333 = vshll.u32 2131351028, %v324
        %v334 = vshrl.u32 2102212464, %v325
        %v335 = vor.u32 %v333, %v334
        %v336 = vshll.u32 2102212464, %v324
        %v337 = vshrl.u32 920167782, %v325
        %v338 = vor.u32 %v336, %v337
        %v339 = vshll.u32 920167782, %v324
        %v340 = vshrl.u32 1326507024, %v325
        %v341 = vor.u32 %v339, %v340
        %vm342 = vcmp.lt.s32.totalorder %v323, 1
        %vm343 = vcmp.lt.s32.totalorder %v323, 2
        %vm344 = vcmp.lt.s32.totalorder %v323, 3
        %vm345 = vcmp.lt.s32.totalorder %v323, 4
        %v346 = vsel %vm342, %v326, %v329
        %v347 = vsel %vm345, %v335, 2102212464
        %v348 = vsel %vm344, %v332, %v347
        %v349 = vsel %vm343, %v346, %v348
        %v350 = vsel %vm342, %v329, %v332
        %v351 = vsel %vm345, %v338, 920167782
        %v352 = vsel %vm344, %v335, %v351
        %v353 = vsel %vm343, %v350, %v352
        %v354 = vsel %vm342, %v332, %v335
        %v355 = vsel %vm345, %v341, 1326507024
        %v356 = vsel %vm344, %v338, %v355
        %v357 = vsel %vm343, %v354, %v356
        %v358 = vshll.u32 %v318, 8
        %v359 = vmul.u32.u64.compose %v358, %v357
        %v360 = vextract.low.u32 %v359
        %v361 = vextract.high.u32 %v359
        %v362 = vmul.u32.u64.compose %v358, %v353
        %v363 = vextract.low.u32 %v362
        %v364 = vextract.high.u32 %v362
        %v365 = vmul.u32 %v358, %v349
        %v366 = vadd.s32 %v361, %v363
        %vm367 = vc.u32 %v361, %v363
        %v368 = vadd.s32 %v364, 1
        %v369 = vsel %vm367, %v368, %v364
        %v370 = vadd.s32 %v365, %v369
        %v371 = vadd.s32 %v370, 536870912
        %v372 = vshrl.u32 %v371, 30
        %v373 = vshll.u32 %v372, 30
        %v374 = vsub.s32 %v370, %v373
        %vm375 = vcmp.lt.s32.totalorder %v374, 0
        %v376 = vsub.s32 0, %v374
        %v377 = vsel %vm375, %v376, %v374
        %v378 = vclz %v377
        %v379 = vsub.s32 %v378, 2
        %vm380 = vcmp.gt.s32.totalorder 0, %v379
        %v381 = vsel %vm380, 0, %v379
        %v382 = vsub.s32 32, %v381
        %v383 = vshll.u32 %v374, %v381
        %v384 = vshrl.u32 %v366, %v382
        %v385 = vor.u32 %v383, %v384
        %v386 = vsub.s32 4294967266, %v381
        %v387 = vadd.s32 %v386, 127
        %v388 = vshll.u32 %v387, 23
        %v389 = vor.u32 4788187, %v388
        %v390 = vand.u32 2147483647, %v389
        %v392 = vcvt.s32.f32 %v385
        %v393 = vmul.f32 %v392, %v390
        %v394 = vxor.u32 %v393, 2147483648
        %v395 = vsel %vm312, %v394, %v393
        %v396 = vsub.s32 4, %v372
        %v397 = vsel %vm312, %v396, %v372
        %v398 = vsel %vm311, %v199, %v395
        %v399 = vsel %vm311, 0, %v397
        %v400 = vcosq.f32.pop %v398
        %v401 = vsinq.f32.pop %v398
        %vm402 = vweird.f32 %v199
        %v403 = vadd.s32 %v399, 3
        %v404 = vand.u32 %v403, 3
        %vm405 = vcmp.lt.s32.totalorder %v404, 2
        %vm406 = vcmp.eq.s32.totalorder %v404, 0
        %v407 = vxor.u32 %v401, 2147483648
        %v408 = vsel %vm406, %v400, %v407
        %vm409 = vcmp.eq.s32.totalorder %v404, 2
        %v410 = vxor.u32 %v400, 2147483648
        %v411 = vsel %vm409, %v410, %v401
        %v412 = vsel %vm405, %v408, %v411
        %v413 = vsel %vm402, nan, %v412
        %v414 = vand.u32 2147483647, %v200
        %vm415 = vcmp.le.f32.partialorder %v414, 0.7853982
        %vm416 = vcmp.lt.s32.totalorder %v200, 0
        %v417 = vand.u32 %v200, 2139095040
        %v418 = vshrl.u32 %v417, 23
        %v419 = vsub.s32 %v418, 127
        %v420 = vand.u32 2147483647, %v200
        %v421 = vand.u32 %v420, 8388607
        %v422 = vor.u32 %v421, 8388608
        %v423 = vsub.s32 0, %v422
        %v424 = vadd.s32 %v419, 1
        %vm425 = vcmp.gt.s32.totalorder %v424, 0
        %v426 = vsel %vm425, %v424, 0
        %v427 = vshrl.u32 %v426, 5
        %v428 = vand.u32 %v426, 31
        %v429 = vsub.s32 32, %v428
        %v430 = vshrl.u32 683565275, %v429
        %v431 = vshll.u32 683565275, %v428
        %v432 = vshrl.u32 2475754826, %v429
        %v433 = vor.u32 %v431, %v432
        %v434 = vshll.u32 2475754826, %v428
        %v435 = vshrl.u32 2131351028, %v429
        %v436 = vor.u32 %v434, %v435
        %v437 = vshll.u32 2131351028, %v428
        %v438 = vshrl.u32 2102212464, %v429
        %v439 = vor.u32 %v437, %v438
        %v440 = vshll.u32 2102212464, %v428
        %v441 = vshrl.u32 920167782, %v429
        %v442 = vor.u32 %v440, %v441
        %v443 = vshll.u32 920167782, %v428
        %v444 = vshrl.u32 1326507024, %v429
        %v445 = vor.u32 %v443, %v444
        %vm446 = vcmp.lt.s32.totalorder %v427, 1
        %vm447 = vcmp.lt.s32.totalorder %v427, 2
        %vm448 = vcmp.lt.s32.totalorder %v427, 3
        %vm449 = vcmp.lt.s32.totalorder %v427, 4
        %v450 = vsel %vm446, %v430, %v433
        %v451 = vsel %vm449, %v439, 2102212464
        %v452 = vsel %vm448, %v436, %v451
        %v453 = vsel %vm447, %v450, %v452
        %v454 = vsel %vm446, %v433, %v436
        %v455 = vsel %vm449, %v442, 920167782
        %v456 = vsel %vm448, %v439, %v455
        %v457 = vsel %vm447, %v454, %v456
        %v458 = vsel %vm446, %v436, %v439
        %v459 = vsel %vm449, %v445, 1326507024
        %v460 = vsel %vm448, %v442, %v459
        %v461 = vsel %vm447, %v458, %v460
        %v462 = vshll.u32 %v422, 8
        %v463 = vmul.u32.u64.compose %v462, %v461
        %v464 = vextract.low.u32 %v463
        %v465 = vextract.high.u32 %v463
        %v466 = vmul.u32.u64.compose %v462, %v457
        %v467 = vextract.low.u32 %v466
        %v468 = vextract.high.u32 %v466
        %v469 = vmul.u32 %v462, %v453
        %v470 = vadd.s32 %v465, %v467
        %vm471 = vc.u32 %v465, %v467
        %v472 = vadd.s32 %v468, 1
        %v473 = vsel %vm471, %v472, %v468
        %v474 = vadd.s32 %v469, %v473
        %v475 = vadd.s32 %v474, 536870912
        %v476 = vshrl.u32 %v475, 30
        %v477 = vshll.u32 %v476, 30
        %v478 = vsub.s32 %v474, %v477
        %vm479 = vcmp.lt.s32.totalorder %v478, 0
        %v480 = vsub.s32 0, %v478
        %v481 = vsel %vm479, %v480, %v478
        %v482 = vclz %v481
        %v483 = vsub.s32 %v482, 2
        %vm484 = vcmp.gt.s32.totalorder 0, %v483
        %v485 = vsel %vm484, 0, %v483
        %v486 = vsub.s32 32, %v485
        %v487 = vshll.u32 %v478, %v485
        %v488 = vshrl.u32 %v470, %v486
        %v489 = vor.u32 %v487, %v488
        %v490 = vsub.s32 4294967266, %v485
        %v491 = vadd.s32 %v490, 127
        %v492 = vshll.u32 %v491, 23
        %v493 = vor.u32 4788187, %v492
        %v494 = vand.u32 2147483647, %v493
        %v496 = vcvt.s32.f32 %v489
        %v497 = vmul.f32 %v496, %v494
        %v498 = vxor.u32 %v497, 2147483648
        %v499 = vsel %vm416, %v498, %v497
        %v500 = vsub.s32 4, %v476
        %v501 = vsel %vm416, %v500, %v476
        %v502 = vsel %vm415, %v200, %v499
        %v503 = vsel %vm415, 0, %v501
        %v504 = vcosq.f32.pop %v502
        %v505 = vsinq.f32.pop %v502
        %vm506 = vweird.f32 %v200
        %v507 = vadd.s32 %v503, 3
        %v508 = vand.u32 %v507, 3
        %vm509 = vcmp.lt.s32.totalorder %v508, 2
        %vm510 = vcmp.eq.s32.totalorder %v508, 0
        %v511 = vxor.u32 %v505, 2147483648
        %v512 = vsel %vm510, %v504, %v511
        %vm513 = vcmp.eq.s32.totalorder %v508, 2
        %v514 = vxor.u32 %v504, 2147483648
        %v515 = vsel %vm513, %v514, %v505
        %v516 = vsel %vm509, %v512, %v515
        %v517 = vsel %vm506, nan, %v516
        %v518 = vand.u32 2147483647, %v201
        %vm519 = vcmp.le.f32.partialorder %v518, 0.7853982
        %vm520 = vcmp.lt.s32.totalorder %v201, 0
        %v521 = vand.u32 %v201, 2139095040
        %v522 = vshrl.u32 %v521, 23
        %v523 = vsub.s32 %v522, 127
        %v524 = vand.u32 2147483647, %v201
        %v525 = vand.u32 %v524, 8388607
        %v526 = vor.u32 %v525, 8388608
        %v527 = vsub.s32 0, %v526
        %v528 = vadd.s32 %v523, 1
        %vm529 = vcmp.gt.s32.totalorder %v528, 0
        %v530 = vsel %vm529, %v528, 0
        %v531 = vshrl.u32 %v530, 5
        %v532 = vand.u32 %v530, 31
        %v533 = vsub.s32 32, %v532
        %v534 = vshrl.u32 683565275, %v533
        %v535 = vshll.u32 683565275, %v532
        %v536 = vshrl.u32 2475754826, %v533
        %v537 = vor.u32 %v535, %v536
        %v538 = vshll.u32 2475754826, %v532
        %v539 = vshrl.u32 2131351028, %v533
        %v540 = vor.u32 %v538, %v539
        %v541 = vshll.u32 2131351028, %v532
        %v542 = vshrl.u32 2102212464, %v533
        %v543 = vor.u32 %v541, %v542
        %v544 = vshll.u32 2102212464, %v532
        %v545 = vshrl.u32 920167782, %v533
        %v546 = vor.u32 %v544, %v545
        %v547 = vshll.u32 920167782, %v532
        %v548 = vshrl.u32 1326507024, %v533
        %v549 = vor.u32 %v547, %v548
        %vm550 = vcmp.lt.s32.totalorder %v531, 1
        %vm551 = vcmp.lt.s32.totalorder %v531, 2
        %vm552 = vcmp.lt.s32.totalorder %v531, 3
        %vm553 = vcmp.lt.s32.totalorder %v531, 4
        %v554 = vsel %vm550, %v534, %v537
        %v555 = vsel %vm553, %v543, 2102212464
        %v556 = vsel %vm552, %v540, %v555
        %v557 = vsel %vm551, %v554, %v556
        %v558 = vsel %vm550, %v537, %v540
        %v559 = vsel %vm553, %v546, 920167782
        %v560 = vsel %vm552, %v543, %v559
        %v561 = vsel %vm551, %v558, %v560
        %v562 = vsel %vm550, %v540, %v543
        %v563 = vsel %vm553, %v549, 1326507024
        %v564 = vsel %vm552, %v546, %v563
        %v565 = vsel %vm551, %v562, %v564
        %v566 = vshll.u32 %v526, 8
        %v567 = vmul.u32.u64.compose %v566, %v565
        %v568 = vextract.low.u32 %v567
        %v569 = vextract.high.u32 %v567
        %v570 = vmul.u32.u64.compose %v566, %v561
        %v571 = vextract.low.u32 %v570
        %v572 = vextract.high.u32 %v570
        %v573 = vmul.u32 %v566, %v557
        %v574 = vadd.s32 %v569, %v571
        %vm575 = vc.u32 %v569, %v571
        %v576 = vadd.s32 %v572, 1
        %v577 = vsel %vm575, %v576, %v572
        %v578 = vadd.s32 %v573, %v577
        %v579 = vadd.s32 %v578, 536870912
        %v580 = vshrl.u32 %v579, 30
        %v581 = vshll.u32 %v580, 30
        %v582 = vsub.s32 %v578, %v581
        %vm583 = vcmp.lt.s32.totalorder %v582, 0
        %v584 = vsub.s32 0, %v582
        %v585 = vsel %vm583, %v584, %v582
        %v586 = vclz %v585
        %v587 = vsub.s32 %v586, 2
        %vm588 = vcmp.gt.s32.totalorder 0, %v587
        %v589 = vsel %vm588, 0, %v587
        %v590 = vsub.s32 32, %v589
        %v591 = vshll.u32 %v582, %v589
        %v592 = vshrl.u32 %v574, %v590
        %v593 = vor.u32 %v591, %v592
        %v594 = vsub.s32 4294967266, %v589
        %v595 = vadd.s32 %v594, 127
        %v596 = vshll.u32 %v595, 23
        %v597 = vor.u32 4788187, %v596
        %v598 = vand.u32 2147483647, %v597
        %v600 = vcvt.s32.f32 %v593
        %v601 = vmul.f32 %v600, %v598
        %v602 = vxor.u32 %v601, 2147483648
        %v603 = vsel %vm520, %v602, %v601
        %v604 = vsub.s32 4, %v580
        %v605 = vsel %vm520, %v604, %v580
        %v606 = vsel %vm519, %v201, %v603
        %v607 = vsel %vm519, 0, %v605
        %v608 = vcosq.f32.pop %v606
        %v609 = vsinq.f32.pop %v606
        %vm610 = vweird.f32 %v201
        %v611 = vadd.s32 %v607, 3
        %v612 = vand.u32 %v611, 3
        %vm613 = vcmp.lt.s32.totalorder %v612, 2
        %vm614 = vcmp.eq.s32.totalorder %v612, 0
        %v615 = vxor.u32 %v609, 2147483648
        %v616 = vsel %vm614, %v608, %v615
        %vm617 = vcmp.eq.s32.totalorder %v612, 2
        %v618 = vxor.u32 %v608, 2147483648
        %v619 = vsel %vm617, %v618, %v609
        %v620 = vsel %vm613, %v616, %v619
        %v621 = vsel %vm610, nan, %v620
        %v622 = vand.u32 2147483647, %v202
        %vm623 = vcmp.le.f32.partialorder %v622, 0.7853982
        %vm624 = vcmp.lt.s32.totalorder %v202, 0
        %v625 = vand.u32 %v202, 2139095040
        %v626 = vshrl.u32 %v625, 23
        %v627 = vsub.s32 %v626, 127
        %v628 = vand.u32 2147483647, %v202
        %v629 = vand.u32 %v628, 8388607
        %v630 = vor.u32 %v629, 8388608
        %v631 = vsub.s32 0, %v630
        %v632 = vadd.s32 %v627, 1
        %vm633 = vcmp.gt.s32.totalorder %v632, 0
        %v634 = vsel %vm633, %v632, 0
        %v635 = vshrl.u32 %v634, 5
        %v636 = vand.u32 %v634, 31
        %v637 = vsub.s32 32, %v636
        %v638 = vshrl.u32 683565275, %v637
        %v639 = vshll.u32 683565275, %v636
        %v640 = vshrl.u32 2475754826, %v637
        %v641 = vor.u32 %v639, %v640
        %v642 = vshll.u32 2475754826, %v636
        %v643 = vshrl.u32 2131351028, %v637
        %v644 = vor.u32 %v642, %v643
        %v645 = vshll.u32 2131351028, %v636
        %v646 = vshrl.u32 2102212464, %v637
        %v647 = vor.u32 %v645, %v646
        %v648 = vshll.u32 2102212464, %v636
        %v649 = vshrl.u32 920167782, %v637
        %v650 = vor.u32 %v648, %v649
        %v651 = vshll.u32 920167782, %v636
        %v652 = vshrl.u32 1326507024, %v637
        %v653 = vor.u32 %v651, %v652
        %vm654 = vcmp.lt.s32.totalorder %v635, 1
        %vm655 = vcmp.lt.s32.totalorder %v635, 2
        %vm656 = vcmp.lt.s32.totalorder %v635, 3
        %vm657 = vcmp.lt.s32.totalorder %v635, 4
        %v658 = vsel %vm654, %v638, %v641
        %v659 = vsel %vm657, %v647, 2102212464
        %v660 = vsel %vm656, %v644, %v659
        %v661 = vsel %vm655, %v658, %v660
        %v662 = vsel %vm654, %v641, %v644
        %v663 = vsel %vm657, %v650, 920167782
        %v664 = vsel %vm656, %v647, %v663
        %v665 = vsel %vm655, %v662, %v664
        %v666 = vsel %vm654, %v644, %v647
        %v667 = vsel %vm657, %v653, 1326507024
        %v668 = vsel %vm656, %v650, %v667
        %v669 = vsel %vm655, %v666, %v668
        %v670 = vshll.u32 %v630, 8
        %v671 = vmul.u32.u64.compose %v670, %v669
        %v672 = vextract.low.u32 %v671
        %v673 = vextract.high.u32 %v671
        %v674 = vmul.u32.u64.compose %v670, %v665
        %v675 = vextract.low.u32 %v674
        %v676 = vextract.high.u32 %v674
        %v677 = vmul.u32 %v670, %v661
        %v678 = vadd.s32 %v673, %v675
        %vm679 = vc.u32 %v673, %v675
        %v680 = vadd.s32 %v676, 1
        %v681 = vsel %vm679, %v680, %v676
        %v682 = vadd.s32 %v677, %v681
        %v683 = vadd.s32 %v682, 536870912
        %v684 = vshrl.u32 %v683, 30
        %v685 = vshll.u32 %v684, 30
        %v686 = vsub.s32 %v682, %v685
        %vm687 = vcmp.lt.s32.totalorder %v686, 0
        %v688 = vsub.s32 0, %v686
        %v689 = vsel %vm687, %v688, %v686
        %v690 = vclz %v689
        %v691 = vsub.s32 %v690, 2
        %vm692 = vcmp.gt.s32.totalorder 0, %v691
        %v693 = vsel %vm692, 0, %v691
        %v694 = vsub.s32 32, %v693
        %v695 = vshll.u32 %v686, %v693
        %v696 = vshrl.u32 %v678, %v694
        %v697 = vor.u32 %v695, %v696
        %v698 = vsub.s32 4294967266, %v693
        %v699 = vadd.s32 %v698, 127
        %v700 = vshll.u32 %v699, 23
        %v701 = vor.u32 4788187, %v700
        %v702 = vand.u32 2147483647, %v701
        %v704 = vcvt.s32.f32 %v697
        %v705 = vmul.f32 %v704, %v702
        %v706 = vxor.u32 %v705, 2147483648
        %v707 = vsel %vm624, %v706, %v705
        %v708 = vsub.s32 4, %v684
        %v709 = vsel %vm624, %v708, %v684
        %v710 = vsel %vm623, %v202, %v707
        %v711 = vsel %vm623, 0, %v709
        %v712 = vcosq.f32.pop %v710
        %v713 = vsinq.f32.pop %v710
        %vm714 = vweird.f32 %v202
        %v715 = vadd.s32 %v711, 3
        %v716 = vand.u32 %v715, 3
        %vm717 = vcmp.lt.s32.totalorder %v716, 2
        %vm718 = vcmp.eq.s32.totalorder %v716, 0
        %v719 = vxor.u32 %v713, 2147483648
        %v720 = vsel %vm718, %v712, %v719
        %vm721 = vcmp.eq.s32.totalorder %v716, 2
        %v722 = vxor.u32 %v712, 2147483648
        %v723 = vsel %vm721, %v722, %v713
        %v724 = vsel %vm717, %v720, %v723
        %v725 = vsel %vm714, nan, %v724
        %v726 = vand.u32 2147483647, %v203
        %vm727 = vcmp.le.f32.partialorder %v726, 0.7853982
        %vm728 = vcmp.lt.s32.totalorder %v203, 0
        %v729 = vand.u32 %v203, 2139095040
        %v730 = vshrl.u32 %v729, 23
        %v731 = vsub.s32 %v730, 127
        %v732 = vand.u32 2147483647, %v203
        %v733 = vand.u32 %v732, 8388607
        %v734 = vor.u32 %v733, 8388608
        %v735 = vsub.s32 0, %v734
        %v736 = vadd.s32 %v731, 1
        %vm737 = vcmp.gt.s32.totalorder %v736, 0
        %v738 = vsel %vm737, %v736, 0
        %v739 = vshrl.u32 %v738, 5
        %v740 = vand.u32 %v738, 31
        %v741 = vsub.s32 32, %v740
        %v742 = vshrl.u32 683565275, %v741
        %v743 = vshll.u32 683565275, %v740
        %v744 = vshrl.u32 2475754826, %v741
        %v745 = vor.u32 %v743, %v744
        %v746 = vshll.u32 2475754826, %v740
        %v747 = vshrl.u32 2131351028, %v741
        %v748 = vor.u32 %v746, %v747
        %v749 = vshll.u32 2131351028, %v740
        %v750 = vshrl.u32 2102212464, %v741
        %v751 = vor.u32 %v749, %v750
        %v752 = vshll.u32 2102212464, %v740
        %v753 = vshrl.u32 920167782, %v741
        %v754 = vor.u32 %v752, %v753
        %v755 = vshll.u32 920167782, %v740
        %v756 = vshrl.u32 1326507024, %v741
        %v757 = vor.u32 %v755, %v756
        %vm758 = vcmp.lt.s32.totalorder %v739, 1
        %vm759 = vcmp.lt.s32.totalorder %v739, 2
        %vm760 = vcmp.lt.s32.totalorder %v739, 3
        %vm761 = vcmp.lt.s32.totalorder %v739, 4
        %v762 = vsel %vm758, %v742, %v745
        %v763 = vsel %vm761, %v751, 2102212464
        %v764 = vsel %vm760, %v748, %v763
        %v765 = vsel %vm759, %v762, %v764
        %v766 = vsel %vm758, %v745, %v748
        %v767 = vsel %vm761, %v754, 920167782
        %v768 = vsel %vm760, %v751, %v767
        %v769 = vsel %vm759, %v766, %v768
        %v770 = vsel %vm758, %v748, %v751
        %v771 = vsel %vm761, %v757, 1326507024
        %v772 = vsel %vm760, %v754, %v771
        %v773 = vsel %vm759, %v770, %v772
        %v774 = vshll.u32 %v734, 8
        %v775 = vmul.u32.u64.compose %v774, %v773
        %v776 = vextract.low.u32 %v775
        %v777 = vextract.high.u32 %v775
        %v778 = vmul.u32.u64.compose %v774, %v769
        %v779 = vextract.low.u32 %v778
        %v780 = vextract.high.u32 %v778
        %v781 = vmul.u32 %v774, %v765
        %v782 = vadd.s32 %v777, %v779
        %vm783 = vc.u32 %v777, %v779
        %v784 = vadd.s32 %v780, 1
        %v785 = vsel %vm783, %v784, %v780
        %v786 = vadd.s32 %v781, %v785
        %v787 = vadd.s32 %v786, 536870912
        %v788 = vshrl.u32 %v787, 30
        %v789 = vshll.u32 %v788, 30
        %v790 = vsub.s32 %v786, %v789
        %vm791 = vcmp.lt.s32.totalorder %v790, 0
        %v792 = vsub.s32 0, %v790
        %v793 = vsel %vm791, %v792, %v790
        %v794 = vclz %v793
        %v795 = vsub.s32 %v794, 2
        %vm796 = vcmp.gt.s32.totalorder 0, %v795
        %v797 = vsel %vm796, 0, %v795
        %v798 = vsub.s32 32, %v797
        %v799 = vshll.u32 %v790, %v797
        %v800 = vshrl.u32 %v782, %v798
        %v801 = vor.u32 %v799, %v800
        %v802 = vsub.s32 4294967266, %v797
        %v803 = vadd.s32 %v802, 127
        %v804 = vshll.u32 %v803, 23
        %v805 = vor.u32 4788187, %v804
        %v806 = vand.u32 2147483647, %v805
        %v808 = vcvt.s32.f32 %v801
        %v809 = vmul.f32 %v808, %v806
        %v810 = vxor.u32 %v809, 2147483648
        %v811 = vsel %vm728, %v810, %v809
        %v812 = vsub.s32 4, %v788
        %v813 = vsel %vm728, %v812, %v788
        %v814 = vsel %vm727, %v203, %v811
        %v815 = vsel %vm727, 0, %v813
        %v816 = vcosq.f32.pop %v814
        %v817 = vsinq.f32.pop %v814
        %vm818 = vweird.f32 %v203
        %v819 = vadd.s32 %v815, 3
        %v820 = vand.u32 %v819, 3
        %vm821 = vcmp.lt.s32.totalorder %v820, 2
        %vm822 = vcmp.eq.s32.totalorder %v820, 0
        %v823 = vxor.u32 %v817, 2147483648
        %v824 = vsel %vm822, %v816, %v823
        %vm825 = vcmp.eq.s32.totalorder %v820, 2
        %v826 = vxor.u32 %v816, 2147483648
        %v827 = vsel %vm825, %v826, %v817
        %v828 = vsel %vm821, %v824, %v827
        %v829 = vsel %vm818, nan, %v828
        %v830 = vand.u32 2147483647, %v204
        %vm831 = vcmp.le.f32.partialorder %v830, 0.7853982
        %vm832 = vcmp.lt.s32.totalorder %v204, 0
        %v833 = vand.u32 %v204, 2139095040
        %v834 = vshrl.u32 %v833, 23
        %v835 = vsub.s32 %v834, 127
        %v836 = vand.u32 2147483647, %v204
        %v837 = vand.u32 %v836, 8388607
        %v838 = vor.u32 %v837, 8388608
        %v839 = vsub.s32 0, %v838
        %v840 = vadd.s32 %v835, 1
        %vm841 = vcmp.gt.s32.totalorder %v840, 0
        %v842 = vsel %vm841, %v840, 0
        %v843 = vshrl.u32 %v842, 5
        %v844 = vand.u32 %v842, 31
        %v845 = vsub.s32 32, %v844
        %v846 = vshrl.u32 683565275, %v845
        %v847 = vshll.u32 683565275, %v844
        %v848 = vshrl.u32 2475754826, %v845
        %v849 = vor.u32 %v847, %v848
        %v850 = vshll.u32 2475754826, %v844
        %v851 = vshrl.u32 2131351028, %v845
        %v852 = vor.u32 %v850, %v851
        %v853 = vshll.u32 2131351028, %v844
        %v854 = vshrl.u32 2102212464, %v845
        %v855 = vor.u32 %v853, %v854
        %v856 = vshll.u32 2102212464, %v844
        %v857 = vshrl.u32 920167782, %v845
        %v858 = vor.u32 %v856, %v857
        %v859 = vshll.u32 920167782, %v844
        %v860 = vshrl.u32 1326507024, %v845
        %v861 = vor.u32 %v859, %v860
        %vm862 = vcmp.lt.s32.totalorder %v843, 1
        %vm863 = vcmp.lt.s32.totalorder %v843, 2
        %vm864 = vcmp.lt.s32.totalorder %v843, 3
        %vm865 = vcmp.lt.s32.totalorder %v843, 4
        %v866 = vsel %vm862, %v846, %v849
        %v867 = vsel %vm865, %v855, 2102212464
        %v868 = vsel %vm864, %v852, %v867
        %v869 = vsel %vm863, %v866, %v868
        %v870 = vsel %vm862, %v849, %v852
        %v871 = vsel %vm865, %v858, 920167782
        %v872 = vsel %vm864, %v855, %v871
        %v873 = vsel %vm863, %v870, %v872
        %v874 = vsel %vm862, %v852, %v855
        %v875 = vsel %vm865, %v861, 1326507024
        %v876 = vsel %vm864, %v858, %v875
        %v877 = vsel %vm863, %v874, %v876
        %v878 = vshll.u32 %v838, 8
        %v879 = vmul.u32.u64.compose %v878, %v877
        %v880 = vextract.low.u32 %v879
        %v881 = vextract.high.u32 %v879
        %v882 = vmul.u32.u64.compose %v878, %v873
        %v883 = vextract.low.u32 %v882
        %v884 = vextract.high.u32 %v882
        %v885 = vmul.u32 %v878, %v869
        %v886 = vadd.s32 %v881, %v883
        %vm887 = vc.u32 %v881, %v883
        %v888 = vadd.s32 %v884, 1
        %v889 = vsel %vm887, %v888, %v884
        %v890 = vadd.s32 %v885, %v889
        %v891 = vadd.s32 %v890, 536870912
        %v892 = vshrl.u32 %v891, 30
        %v893 = vshll.u32 %v892, 30
        %v894 = vsub.s32 %v890, %v893
        %vm895 = vcmp.lt.s32.totalorder %v894, 0
        %v896 = vsub.s32 0, %v894
        %v897 = vsel %vm895, %v896, %v894
        %v898 = vclz %v897
        %v899 = vsub.s32 %v898, 2
        %vm900 = vcmp.gt.s32.totalorder 0, %v899
        %v901 = vsel %vm900, 0, %v899
        %v902 = vsub.s32 32, %v901
        %v903 = vshll.u32 %v894, %v901
        %v904 = vshrl.u32 %v886, %v902
        %v905 = vor.u32 %v903, %v904
        %v906 = vsub.s32 4294967266, %v901
        %v907 = vadd.s32 %v906, 127
        %v908 = vshll.u32 %v907, 23
        %v909 = vor.u32 4788187, %v908
        %v910 = vand.u32 2147483647, %v909
        %v912 = vcvt.s32.f32 %v905
        %v913 = vmul.f32 %v912, %v910
        %v914 = vxor.u32 %v913, 2147483648
        %v915 = vsel %vm832, %v914, %v913
        %v916 = vsub.s32 4, %v892
        %v917 = vsel %vm832, %v916, %v892
        %v918 = vsel %vm831, %v204, %v915
        %v919 = vsel %vm831, 0, %v917
        %v920 = vcosq.f32.pop %v918
        %v921 = vsinq.f32.pop %v918
        %vm922 = vweird.f32 %v204
        %v923 = vadd.s32 %v919, 3
        %v924 = vand.u32 %v923, 3
        %vm925 = vcmp.lt.s32.totalorder %v924, 2
        %vm926 = vcmp.eq.s32.totalorder %v924, 0
        %v927 = vxor.u32 %v921, 2147483648
        %v928 = vsel %vm926, %v920, %v927
        %vm929 = vcmp.eq.s32.totalorder %v924, 2
        %v930 = vxor.u32 %v920, 2147483648
        %v931 = vsel %vm929, %v930, %v921
        %v932 = vsel %vm925, %v928, %v931
        %v933 = vsel %vm922, nan, %v932
        %v934 = vand.u32 2147483647, %v205
        %vm935 = vcmp.le.f32.partialorder %v934, 0.7853982
        %vm936 = vcmp.lt.s32.totalorder %v205, 0
        %v937 = vand.u32 %v205, 2139095040
        %v938 = vshrl.u32 %v937, 23
        %v939 = vsub.s32 %v938, 127
        %v940 = vand.u32 2147483647, %v205
        %v941 = vand.u32 %v940, 8388607
        %v942 = vor.u32 %v941, 8388608
        %v943 = vsub.s32 0, %v942
        %v944 = vadd.s32 %v939, 1
        %vm945 = vcmp.gt.s32.totalorder %v944, 0
        %v946 = vsel %vm945, %v944, 0
        %v947 = vshrl.u32 %v946, 5
        %v948 = vand.u32 %v946, 31
        %v949 = vsub.s32 32, %v948
        %v950 = vshrl.u32 683565275, %v949
        %v951 = vshll.u32 683565275, %v948
        %v952 = vshrl.u32 2475754826, %v949
        %v953 = vor.u32 %v951, %v952
        %v954 = vshll.u32 2475754826, %v948
        %v955 = vshrl.u32 2131351028, %v949
        %v956 = vor.u32 %v954, %v955
        %v957 = vshll.u32 2131351028, %v948
        %v958 = vshrl.u32 2102212464, %v949
        %v959 = vor.u32 %v957, %v958
        %v960 = vshll.u32 2102212464, %v948
        %v961 = vshrl.u32 920167782, %v949
        %v962 = vor.u32 %v960, %v961
        %v963 = vshll.u32 920167782, %v948
        %v964 = vshrl.u32 1326507024, %v949
        %v965 = vor.u32 %v963, %v964
        %vm966 = vcmp.lt.s32.totalorder %v947, 1
        %vm967 = vcmp.lt.s32.totalorder %v947, 2
        %vm968 = vcmp.lt.s32.totalorder %v947, 3
        %vm969 = vcmp.lt.s32.totalorder %v947, 4
        %v970 = vsel %vm966, %v950, %v953
        %v971 = vsel %vm969, %v959, 2102212464
        %v972 = vsel %vm968, %v956, %v971
        %v973 = vsel %vm967, %v970, %v972
        %v974 = vsel %vm966, %v953, %v956
        %v975 = vsel %vm969, %v962, 920167782
        %v976 = vsel %vm968, %v959, %v975
        %v977 = vsel %vm967, %v974, %v976
        %v978 = vsel %vm966, %v956, %v959
        %v979 = vsel %vm969, %v965, 1326507024
        %v980 = vsel %vm968, %v962, %v979
        %v981 = vsel %vm967, %v978, %v980
        %v982 = vshll.u32 %v942, 8
        %v983 = vmul.u32.u64.compose %v982, %v981
        %v984 = vextract.low.u32 %v983
        %v985 = vextract.high.u32 %v983
        %v986 = vmul.u32.u64.compose %v982, %v977
        %v987 = vextract.low.u32 %v986
        %v988 = vextract.high.u32 %v986
        %v989 = vmul.u32 %v982, %v973
        %v990 = vadd.s32 %v985, %v987
        %vm991 = vc.u32 %v985, %v987
        %v992 = vadd.s32 %v988, 1
        %v993 = vsel %vm991, %v992, %v988
        %v994 = vadd.s32 %v989, %v993
        %v995 = vadd.s32 %v994, 536870912
        %v996 = vshrl.u32 %v995, 30
        %v997 = vshll.u32 %v996, 30
        %v998 = vsub.s32 %v994, %v997
        %vm999 = vcmp.lt.s32.totalorder %v998, 0
        %v1000 = vsub.s32 0, %v998
        %v1001 = vsel %vm999, %v1000, %v998
        %v1002 = vclz %v1001
        %v1003 = vsub.s32 %v1002, 2
        %vm1004 = vcmp.gt.s32.totalorder 0, %v1003
        %v1005 = vsel %vm1004, 0, %v1003
        %v1006 = vsub.s32 32, %v1005
        %v1007 = vshll.u32 %v998, %v1005
        %v1008 = vshrl.u32 %v990, %v1006
        %v1009 = vor.u32 %v1007, %v1008
        %v1010 = vsub.s32 4294967266, %v1005
        %v1011 = vadd.s32 %v1010, 127
        %v1012 = vshll.u32 %v1011, 23
        %v1013 = vor.u32 4788187, %v1012
        %v1014 = vand.u32 2147483647, %v1013
        %v1016 = vcvt.s32.f32 %v1009
        %v1017 = vmul.f32 %v1016, %v1014
        %v1018 = vxor.u32 %v1017, 2147483648
        %v1019 = vsel %vm936, %v1018, %v1017
        %v1020 = vsub.s32 4, %v996
        %v1021 = vsel %vm936, %v1020, %v996
        %v1022 = vsel %vm935, %v205, %v1019
        %v1023 = vsel %vm935, 0, %v1021
        %v1024 = vcosq.f32.pop %v1022
        %v1025 = vsinq.f32.pop %v1022
        %vm1026 = vweird.f32 %v205
        %v1027 = vadd.s32 %v1023, 3
        %v1028 = vand.u32 %v1027, 3
        %vm1029 = vcmp.lt.s32.totalorder %v1028, 2
        %vm1030 = vcmp.eq.s32.totalorder %v1028, 0
        %v1031 = vxor.u32 %v1025, 2147483648
        %v1032 = vsel %vm1030, %v1024, %v1031
        %vm1033 = vcmp.eq.s32.totalorder %v1028, 2
        %v1034 = vxor.u32 %v1024, 2147483648
        %v1035 = vsel %vm1033, %v1034, %v1025
        %v1036 = vsel %vm1029, %v1032, %v1035
        %v1037 = vsel %vm1026, nan, %v1036
        %v1038 = vld [vmem:[%s141] sm:$0xff]
        %v1039 = vld [vmem:[%s141 + $0x8] sm:$0xff]
        %v1040 = vld [vmem:[%s141 + $0x10] sm:$0xff]
        %v1041 = vld [vmem:[%s141 + $0x18] sm:$0xff]
        %v1042 = vld [vmem:[%s141 + $0x20] sm:$0xff]
        %v1043 = vld [vmem:[%s141 + $0x28] sm:$0xff]
        %v1044 = vld [vmem:[%s141 + $0x30] sm:$0xff]
        %v1045 = vld [vmem:[%s141 + $0x38] sm:$0xff]
        %v1046 = vadd.f32 %v1038, %v309
        %v1047 = vadd.f32 %v1039, %v413
        %v1048 = vadd.f32 %v1040, %v517
        %v1049 = vadd.f32 %v1041, %v621
        %v1050 = vadd.f32 %v1042, %v725
        %v1051 = vadd.f32 %v1043, %v829
        %v1052 = vadd.f32 %v1044, %v933
        %v1053 = vadd.f32 %v1045, %v1037
        %1054 = vst [vmem:[%s161] sm:$0xff] %v1046
        %1055 = vst [vmem:[%s161 + $0x8] sm:$0xff] %v1047
        %1056 = vst [vmem:[%s161 + $0x10] sm:$0xff] %v1048
        %1057 = vst [vmem:[%s161 + $0x18] sm:$0xff] %v1049
        %1058 = vst [vmem:[%s161 + $0x20] sm:$0xff] %v1050
        %1059 = vst [vmem:[%s161 + $0x28] sm:$0xff] %v1051
        %1060 = vst [vmem:[%s161 + $0x30] sm:$0xff] %v1052
        %1061 = vst [vmem:[%s161 + $0x38] sm:$0xff] %v1053
        %s1062 = sand.u32 %s74, 1
        %s1063 = scalar_lea.sflag [#allocation4], %s1062
        %s1064 = sand.u32 %s74, 1
        %s1065 = smul.addr %s1064, 64
        %s1066 = scalar_lea.vmem [#allocation5], %s1065
        // Predicated region
        $region33: #{tpu_custom_call.1} parent=27 // pred_check
          %p1067 = pneg %p84
        $region34: #{tpu_custom_call.1} parent=27 // pred_check_branch
          %1069 = sbr.rel (%p1067) target = $region36
        $region35: #{tpu_custom_call.1} parent=27 // pred_region
          %s1070 = smul.u32 8, %s19
          %s1072 = ssub.s32 1024, 1024
          %1073 = vsyncadd %s1063, %s1072
          %s1074 = smul.addr %s1070, 128
          %s1075 = scalar_lea.hbm %s2, %s1074
          %s1076 = sshll.u32 %s1066, 4
          %s1077 = int_to_ptr.vmem [resolvable:$true] %s1076
          %1082 = dma.vmem_to_hbm [thread:$0]  %s1077, 1024, %s1075, %s1063, 128, 128, 8
        $region36: #{tpu_custom_call.1} parent=27 // pred_fallthru
          _
      $region28: #{tpu_custom_call.1} parent=5 // pred_fallthru
        _
      %p1083 = scmp.le.s32.totalorder 2, %s14
      // Predicated region
      $region37: #{tpu_custom_call.1} parent=5 // pred_check
        %p1084 = pneg %p1083
      $region38: #{tpu_custom_call.1} parent=5 // pred_check_branch
        %1086 = sbr.rel (%p1084) target = $region40
      $region39: #{tpu_custom_call.1} parent=5 // pred_region
        %s1087 = ssub.s32 %s14, 2
        // Predicated region
        $region41: #{tpu_custom_call.1} parent=39 // pred_check
          %p1088 = pneg %p90
        $region42: #{tpu_custom_call.1} parent=39 // pred_check_branch
          %1090 = sbr.rel (%p1088) target = $region44
        $region43: #{tpu_custom_call.1} parent=39 // pred_region
          %s1091 = sand.u32 %s75, 1
          %s1092 = scalar_lea.sflag [#allocation4], %s1091
          %s1093 = sand.u32 %s75, 1
          %s1094 = smul.addr %s1093, 64
          %s1095 = scalar_lea.vmem [#allocation5], %s1094
          %1096 = dma.done %s1092, 1024
        $region44: #{tpu_custom_call.1} parent=39 // pred_fallthru
          _
      $region40: #{tpu_custom_call.1} parent=5 // pred_fallthru
        _
    $region6: #{tpu_custom_call.1} parent=1 // loop_footer
      %s18 = sadd.s32 1, %s14
    $region7: #{tpu_custom_call.1} parent=1 // loop_footer_branch
      %13 = sbr.rel target = $region3
    $region8: #{tpu_custom_call.1} parent=1 // loop_exit
      _
    %1097 = vsyncpa [#allocation3], 1
    %s1098 = scalar_lea.sflag [#allocation3], 1
    %1099 = vsyncpa %s1098, 1
    %1100 = vsyncpa [#allocation4], 1
    %s1101 = scalar_lea.sflag [#allocation4], 1
    %1102 = vsyncpa %s1101, 1

</llo_original>
